<compile_context>
chip_gen: v7x
topology: tpu7x:2x2x1
jax: 0.10.0
libtpu: 0.0.40
codegen_flags: <defaults>
</compile_context>

<pallas_src>
import jax
import jax.numpy as jnp
from jax.experimental import pallas as pl
from jax.experimental.pallas import tpu as pltpu


def gcn_layer1_kernel(adj_ref, x_ref, w1_ref, b1_ref, h_ref):
    # (A_hat @ X) @ W1   -- reassociated: propagation contracts over F (small).
    ax = jnp.dot(adj_ref[...], x_ref[...], preferred_element_type=jnp.float32)
    h = jnp.dot(ax.astype(jnp.bfloat16), w1_ref[...],
                preferred_element_type=jnp.float32)
    h = jnp.maximum(h + b1_ref[...], 0.0)          # bias + ReLU in f32
    h_ref[...] = h.astype(h_ref.dtype)


def gcn_layer2_kernel(adj_ref, h_ref, w2_ref, b2_ref, out_ref):
    # A_hat @ (H @ W2)   -- project to O (=8) first, then propagate (O << H).
    hw = jnp.dot(h_ref[...], w2_ref[...], preferred_element_type=jnp.float32)
    y = jnp.dot(adj_ref[...], hw.astype(jnp.bfloat16),
                preferred_element_type=jnp.float32)
    out_ref[...] = (y + b2_ref[...]).astype(out_ref.dtype)


def model_forward(adj, x, w1, b1, w2, b2, *, row_tile=256):
    """Two-layer GCN forward.  adj: [N,N] normalized dense adjacency."""
    N, Fdim = x.shape
    Hd = w1.shape[1]
    O = w2.shape[1]

    # bf16 operands for the MXU; biases stay f32 (elementwise path).
    adj_bf = adj.astype(jnp.bfloat16)
    x_bf = x.astype(jnp.bfloat16)
    w1_bf = w1.astype(jnp.bfloat16)
    w2_bf = w2.astype(jnp.bfloat16)
    b1_f = b1.astype(jnp.float32)
    b2_f = b2.astype(jnp.float32)

    tm = min(row_tile, N)                 # adjacency row tile
    grid = (pl.cdiv(N, tm),)
    cparams = pltpu.CompilerParams(
        dimension_semantics=("parallel",),          # megacore-shard row tiles
        vmem_limit_bytes=64 * 1024 * 1024,
    )

    def full(shape):
        return pl.BlockSpec(shape, lambda i: (0,) * len(shape))

    def row(cols):
        return pl.BlockSpec((tm, cols), lambda i: (i, 0))

    # ---- layer 1: h1 = relu((A @ X) @ W1 + b1), emitted as bf16 [N, Hd] ----
    cost1 = pl.CostEstimate(
        flops=2 * N * N * Fdim + 2 * N * Fdim * Hd,
        transcendentals=0,
        bytes_accessed=2 * (N * N + N * Fdim + Fdim * Hd + N * Hd) + 4 * Hd,
    )
    h1 = pl.pallas_call(
        gcn_layer1_kernel,
        out_shape=jax.ShapeDtypeStruct((N, Hd), jnp.bfloat16),
        grid=grid,
        in_specs=[row(N), full((N, Fdim)), full((Fdim, Hd)), full((1, Hd))],
        out_specs=pl.BlockSpec((tm, Hd), lambda i: (i, 0)),
        compiler_params=cparams,
        cost_estimate=cost1,
    )(adj_bf, x_bf, w1_bf, b1_f)

    # ---- layer 2: y = A @ (h1 @ W2) + b2, f32 output [N, O] ----------------
    cost2 = pl.CostEstimate(
        flops=2 * N * Hd * O + 2 * N * N * O,
        transcendentals=0,
        bytes_accessed=2 * (N * N + N * Hd + Hd * O) + 4 * (O + N * O),
    )
    out = pl.pallas_call(
        gcn_layer2_kernel,
        out_shape=jax.ShapeDtypeStruct((N, O), jnp.float32),
        grid=grid,
        in_specs=[row(N), full((N, Hd)), full((Hd, O)), full((1, O))],
        out_specs=pl.BlockSpec((tm, O), lambda i: (i, 0)),
        compiler_params=cparams,
        cost_estimate=cost2,
    )(adj_bf, h1, w2_bf, b2_f)
    return out


def normalized_adjacency(edge_index, num_nodes):
    # dense A, add self loops, D^-1/2 (A + I) D^-1/2   (plain-JAX glue)
    src, dst = edge_index
    A = jnp.zeros((num_nodes, num_nodes), jnp.float32)
    A = A.at[src, dst].set(1.0)
    A = A.at[dst, src].set(1.0)          # undirected
    A = A + jnp.eye(num_nodes, dtype=jnp.float32)
    deg = A.sum(axis=1)
    d_inv_sqrt = 1.0 / jnp.sqrt(deg)
    return A * d_inv_sqrt[:, None] * d_inv_sqrt[None, :]


if __name__ == "__main__":
    # small shapes: N nodes, feature_num=32, hidden=256 (heads=1), output_num=8
    N, F, H, O = 8, 32, 256, 8

    key = jax.random.PRNGKey(0)
    k_x, k_w1, k_w2 = jax.random.split(key, 3)

    x = jax.random.normal(k_x, (N, F), jnp.float32)

    # simple deterministic ring graph
    src = jnp.arange(N, dtype=jnp.int32)
    dst = (src + 1) % N
    edge_index = jnp.stack([src, dst], axis=0)
    adj = normalized_adjacency(edge_index, N)

    # glorot-style deterministic init; biases zero (like reset_parameters)
    w1 = jax.random.normal(k_w1, (F, H), jnp.float32) * (2.0 / (F + H)) ** 0.5
    b1 = jnp.zeros((1, H), jnp.float32)
    w2 = jax.random.normal(k_w2, (H, O), jnp.float32) * (2.0 / (H + O)) ** 0.5
    b2 = jnp.zeros((1, O), jnp.float32)

    out = model_forward(adj, x, w1, b1, w2, b2)
    out = jax.block_until_ready(out)

    # reference check in plain JAX (mirror the bf16 operand casts of the kernel)
    adj_r = adj.astype(jnp.bfloat16).astype(jnp.float32)
    x_r = x.astype(jnp.bfloat16).astype(jnp.float32)
    w1_r = w1.astype(jnp.bfloat16).astype(jnp.float32)
    w2_r = w2.astype(jnp.bfloat16).astype(jnp.float32)
    h_ref = jnp.maximum((adj_r @ x_r) @ w1_r + b1, 0.0)
    h_ref = h_ref.astype(jnp.bfloat16).astype(jnp.float32)   # h1 stored as bf16
    y_ref = adj_r @ (h_ref @ w2_r) + b2
    assert jnp.allclose(out, y_ref, atol=3e-2, rtol=3e-2), (
        float(jnp.max(jnp.abs(out - y_ref))))

    print("KERNEL_OK")
</pallas_src>

<mosaic_0001>
module attributes {stable_mosaic.version = 11 : i64} {
  func.func @gcn_layer1_kernel(%arg0: i32, %arg1: memref<8x8xbf16, #tpu.memory_space<vmem>>, %arg2: memref<8x32xbf16, #tpu.memory_space<vmem>>, %arg3: memref<32x256xbf16, #tpu.memory_space<vmem>>, %arg4: memref<1x256xf32, #tpu.memory_space<vmem>>, %arg5: memref<8x256xbf16, #tpu.memory_space<vmem>>) attributes {dimension_semantics = [#tpu.dimension_semantics<parallel>], iteration_bounds = array<i64: 1>, scalar_prefetch = 0 : i64, scratch_operands = 0 : i64, tpu.core_type = #tpu.core_type<tc>, window_params = [{transform_indices = @transform_0, window_bounds = array<i64: 8, 8>}, {pipeline_mode = #tpu.pipeline_mode<synchronous>, transform_indices = @transform_1, window_bounds = array<i64: 8, 32>}, {pipeline_mode = #tpu.pipeline_mode<synchronous>, transform_indices = @transform_2, window_bounds = array<i64: 32, 256>}, {pipeline_mode = #tpu.pipeline_mode<synchronous>, transform_indices = @transform_3, window_bounds = array<i64: 1, 256>}, {transform_indices = @transform_4, window_bounds = array<i64: 8, 256>}]} {
    %c0 = arith.constant 0 : index
    %c0_0 = arith.constant 0 : index
    %0 = vector.load %arg1[%c0, %c0_0] : memref<8x8xbf16, #tpu.memory_space<vmem>>, vector<8x8xbf16>
    %c0_1 = arith.constant 0 : index
    %c0_2 = arith.constant 0 : index
    %1 = vector.load %arg2[%c0_1, %c0_2] : memref<8x32xbf16, #tpu.memory_space<vmem>>, vector<8x32xbf16>
    %cst = arith.constant dense<0.000000e+00> : vector<8x32xf32>
    %2 = tpu.matmul %0, %1, %cst {dimension_numbers = #tpu.dot_dimension_numbers<[1], [0], [0], [1], [0, 0, 1, 1], [], []>} : vector<8x8xbf16>, vector<8x32xbf16>, vector<8x32xf32> -> vector<8x32xf32>
    %3 = arith.truncf %2 : vector<8x32xf32> to vector<8x32xbf16>
    %c0_3 = arith.constant 0 : index
    %c0_4 = arith.constant 0 : index
    %4 = vector.load %arg3[%c0_3, %c0_4] : memref<32x256xbf16, #tpu.memory_space<vmem>>, vector<32x256xbf16>
    %cst_5 = arith.constant dense<0.000000e+00> : vector<8x256xf32>
    %5 = tpu.matmul %3, %4, %cst_5 {dimension_numbers = #tpu.dot_dimension_numbers<[1], [0], [0], [1], [0, 0, 1, 1], [], []>} : vector<8x32xbf16>, vector<32x256xbf16>, vector<8x256xf32> -> vector<8x256xf32>
    %c0_6 = arith.constant 0 : index
    %c0_7 = arith.constant 0 : index
    %6 = vector.load %arg4[%c0_6, %c0_7] : memref<1x256xf32, #tpu.memory_space<vmem>>, vector<1x256xf32>
    %7 = vector.broadcast %6 : vector<1x256xf32> to vector<8x256xf32>
    %8 = arith.addf %5, %7 : vector<8x256xf32>
    %cst_8 = arith.constant 0.000000e+00 : f32
    %9 = vector.broadcast %cst_8 : f32 to vector<8x256xf32>
    %10 = arith.maximumf %8, %9 : vector<8x256xf32>
    %11 = arith.truncf %10 : vector<8x256xf32> to vector<8x256xbf16>
    %c0_9 = arith.constant 0 : index
    %c0_10 = arith.constant 0 : index
    %12 = vector.load %arg5[%c0_9, %c0_10] : memref<8x256xbf16, #tpu.memory_space<vmem>>, vector<8x256xbf16>
    tpu.vector_store %arg5[%c0_9, %c0_10], %11 {strides = array<i32>} : memref<8x256xbf16, #tpu.memory_space<vmem>>, vector<8x256xbf16>,
    return
  }
  func.func @transform_0(%arg0: i32) -> (i32, i32) {
    %c0_i32 = arith.constant 0 : i32
    %c0_i32_0 = arith.constant 0 : i32
    return %arg0, %c0_i32 : i32, i32
  }
  func.func @transform_1(%arg0: i32) -> (i32, i32) {
    %c0_i32 = arith.constant 0 : i32
    %c0_i32_0 = arith.constant 0 : i32
    %c0_i32_1 = arith.constant 0 : i32
    return %c0_i32, %c0_i32_0 : i32, i32
  }
  func.func @transform_2(%arg0: i32) -> (i32, i32) {
    %c0_i32 = arith.constant 0 : i32
    %c0_i32_0 = arith.constant 0 : i32
    %c0_i32_1 = arith.constant 0 : i32
    return %c0_i32, %c0_i32_0 : i32, i32
  }
  func.func @transform_3(%arg0: i32) -> (i32, i32) {
    %c0_i32 = arith.constant 0 : i32
    %c0_i32_0 = arith.constant 0 : i32
    %c0_i32_1 = arith.constant 0 : i32
    return %c0_i32, %c0_i32_0 : i32, i32
  }
  func.func @transform_4(%arg0: i32) -> (i32, i32) {
    %c0_i32 = arith.constant 0 : i32
    %c0_i32_0 = arith.constant 0 : i32
    return %arg0, %c0_i32 : i32, i32
  }
}

</mosaic_0001>

<llo_original>
// kernel: tpu_custom_call.1
$region0: #{tpu_custom_call.1}
  #allocation0 [shape = 'u32[]', space=smem, size = 0x4, offset = 0x4, fixed_abs, tag = 'smem constant byte address 0x4 - core index']
  #allocation1 [shape = 'u32[144,128]{1,0:T(1,128)}', space=vmem, size = 0x12000, scoped, tag = 'internal scratch']
  %s0 = inlined_call_operand.hbm [shape: bf16[8,8], index: 0, kind: input, shape index: {}]
  %s1 = inlined_call_operand.hbm [shape: bf16[8,32], index: 1, kind: input, shape index: {}]
  %s2 = inlined_call_operand.hbm [shape: bf16[32,256], index: 2, kind: input, shape index: {}]
  %s3 = inlined_call_operand.hbm [shape: f32[1,256], index: 3, kind: input, shape index: {}]
  %s4 = inlined_call_operand.hbm [shape: bf16[8,256], index: 4, kind: output, shape index: {}]
  %s5 = sld [smem:[#allocation0]]
  $region42: #{tpu_custom_call.1} parent=0
    _
  %s7 = ssub.s32 1, %s5
  %s8 = scalar_select 0, %s7, %s5
  $region1: #{tpu_custom_call.1} parent=0
    #allocation2 [shape = 'u8[2048]{0}', space=vmem, size = 0x800, scoped, tag = 'input window, operand 0, single buffered']
    #allocation3 [shape = 's32[1]{0}', space=sflag, size = 0x4, scoped, tag = 'scoped memory for tpu_custom_call.1']
    #allocation4 [shape = 's32[1]{0}', space=sflag, size = 0x4, scoped, tag = 'scoped memory for tpu_custom_call.1']
    #allocation5 [shape = 'u8[2048]{0}', space=vmem, size = 0x800, scoped, tag = 'input window, operand 1, single buffered']
    #allocation6 [shape = 's32[1]{0}', space=sflag, size = 0x4, scoped, tag = 'scoped memory for tpu_custom_call.1']
    #allocation7 [shape = 'u8[16384]{0}', space=vmem, size = 0x4000, scoped, tag = 'input window, operand 2, single buffered']
    #allocation8 [shape = 'u8[1024]{0}', space=vmem, size = 0x400, scoped, tag = 'input window, operand 3, single buffered']
    #allocation9 [shape = 's32[1]{0}', space=sflag, size = 0x4, scoped, tag = 'scoped memory for tpu_custom_call.1']
    #allocation10 [shape = 'u8[4096]{0}', space=vmem, size = 0x1000, scoped, tag = 'output window, operand 0, single buffered']
    %9 = vsyncpa [#allocation3], 0
    %10 = vsyncpa [#allocation6], 0
    %11 = vsyncpa [#allocation9], 0
    %12 = vsyncpa [#allocation4], 0
    // Predicated region
    $region2: #{tpu_custom_call.1} parent=1 // pred_check
      _
    $region3: #{tpu_custom_call.1} parent=1 // pred_check_branch
      %14 = sbr.rel (0) target = $region5
    $region4: #{tpu_custom_call.1} parent=1 // pred_region
      %s16 = ssub.s32 64, 64
      %17 = vsyncadd [#allocation3], %s16
      %s19 = sshll.u32 [#allocation2], 4
      %s20 = int_to_ptr.vmem [resolvable:$true] %s19
      %22 = dma.hbm_to_vmem [thread:$0]  %s0, 64, %s20, [#allocation3]
    $region5: #{tpu_custom_call.1} parent=1 // pred_fallthru
      _
    // Predicated region
    $region6: #{tpu_custom_call.1} parent=1 // pred_check
      _
    $region7: #{tpu_custom_call.1} parent=1 // pred_check_branch
      %24 = sbr.rel (0) target = $region9
    $region8: #{tpu_custom_call.1} parent=1 // pred_region
      %s26 = ssub.s32 64, 64
      %27 = vsyncadd [#allocation6], %s26
      %s29 = sshll.u32 [#allocation5], 4
      %s30 = int_to_ptr.vmem [resolvable:$true] %s29
      %32 = dma.hbm_to_vmem [thread:$0]  %s1, 64, %s30, [#allocation6]
    $region9: #{tpu_custom_call.1} parent=1 // pred_fallthru
      _
    // Predicated region
    $region10: #{tpu_custom_call.1} parent=1 // pred_check
      _
    $region11: #{tpu_custom_call.1} parent=1 // pred_check_branch
      %34 = sbr.rel (0) target = $region13
    $region12: #{tpu_custom_call.1} parent=1 // pred_region
      %s36 = ssub.s32 512, 512
      %37 = vsyncadd [#allocation6], %s36
      %s38 = sshll.u32 [#allocation7], 4
      %s39 = int_to_ptr.vmem [resolvable:$true] %s38
      %44 = dma.hbm_to_vmem [thread:$0]  %s2, 512, %s39, [#allocation6], 128, 128, 8
    $region13: #{tpu_custom_call.1} parent=1 // pred_fallthru
      _
    // Predicated region
    $region14: #{tpu_custom_call.1} parent=1 // pred_check
      _
    $region15: #{tpu_custom_call.1} parent=1 // pred_check_branch
      %46 = sbr.rel (0) target = $region17
    $region16: #{tpu_custom_call.1} parent=1 // pred_region
      %s48 = ssub.s32 32, 32
      %49 = vsyncadd [#allocation9], %s48
      %s51 = sshll.u32 [#allocation8], 4
      %s52 = int_to_ptr.vmem [resolvable:$true] %s51
      %54 = dma.hbm_to_vmem [thread:$0]  %s3, 32, %s52, [#allocation9]
    $region17: #{tpu_custom_call.1} parent=1 // pred_fallthru
      _
    // Predicated region
    $region18: #{tpu_custom_call.1} parent=1 // pred_check
      _
    $region19: #{tpu_custom_call.1} parent=1 // pred_check_branch
      %56 = sbr.rel (0) target = $region21
    $region20: #{tpu_custom_call.1} parent=1 // pred_region
      %57 = dma.done [#allocation3], 64
    $region21: #{tpu_custom_call.1} parent=1 // pred_fallthru
      _
    // Predicated region
    $region22: #{tpu_custom_call.1} parent=1 // pred_check
      _
    $region23: #{tpu_custom_call.1} parent=1 // pred_check_branch
      %59 = sbr.rel (0) target = $region25
    $region24: #{tpu_custom_call.1} parent=1 // pred_region
      %60 = dma.done [#allocation6], 64
    $region25: #{tpu_custom_call.1} parent=1 // pred_fallthru
      _
    // Predicated region
    $region26: #{tpu_custom_call.1} parent=1 // pred_check
      _
    $region27: #{tpu_custom_call.1} parent=1 // pred_check_branch
      %62 = sbr.rel (0) target = $region29
    $region28: #{tpu_custom_call.1} parent=1 // pred_region
      %63 = dma.done [#allocation6], 512
    $region29: #{tpu_custom_call.1} parent=1 // pred_fallthru
      _
    // Predicated region
    $region30: #{tpu_custom_call.1} parent=1 // pred_check
      _
    $region31: #{tpu_custom_call.1} parent=1 // pred_check_branch
      %65 = sbr.rel (0) target = $region33
    $region32: #{tpu_custom_call.1} parent=1 // pred_region
      %66 = dma.done [#allocation9], 32
    $region33: #{tpu_custom_call.1} parent=1 // pred_fallthru
      _
    %v68 = vld [vmem:[#allocation2] sm:$0xf]
    %v69 = vld [vmem:[#allocation5] sm:$0xf]
    %vm70 = vcmask 64512
    %v72 = vsel %vm70, %v68, 0
    %vm74 = vcmask 1043456
    %v76 = vsel %vm74, %v69, 0
    %78 = vmatprep.subr.bf16.mxu0 0
    %79 = vmatpush1.bf16.msra.mxu0 %v76
    %80 = vmatprep.subr.bf16.mxu0 0
    %81 = vmatpush1.bf16.msra.mxu0 0
    %82 = vmatprep.subr.bf16.mxu0 0
    %83 = vmatpush1.bf16.msra.mxu0 0
    %84 = vmatprep.subr.bf16.mxu0 0
    %85 = vmatpush1.bf16.msra.mxu0 0
    %86 = vmatprep.subr.bf16.mxu0 0
    %87 = vmatpush1.bf16.msra.mxu0 0
    %88 = vmatprep.subr.bf16.mxu0 0
    %89 = vmatpush1.bf16.msra.mxu0 0
    %90 = vmatprep.subr.bf16.mxu0 0
    %91 = vmatpush1.bf16.msra.mxu0 0
    %92 = vmatprep.subr.bf16.mxu0 0
    %93 = vmatpush1.bf16.msra.mxu0 0
    %94 = vmatprep.subr.bf16.mxu0 0
    %95 = vmatpush1.bf16.msra.mxu0 0
    %96 = vmatprep.subr.bf16.mxu0 0
    %97 = vmatpush1.bf16.msra.mxu0 0
    %98 = vmatprep.subr.bf16.mxu0 0
    %99 = vmatpush1.bf16.msra.mxu0 0
    %100 = vmatprep.subr.bf16.mxu0 0
    %101 = vmatpush1.bf16.msra.mxu0 0
    %102 = vmatprep.subr.bf16.mxu0 0
    %103 = vmatpush1.bf16.msra.mxu0 0
    %104 = vmatprep.subr.bf16.mxu0 0
    %105 = vmatpush1.bf16.msra.mxu0 0
    %106 = vmatprep.subr.bf16.mxu0 0
    %107 = vmatpush1.bf16.msra.mxu0 0
    %108 = vmatprep.subr.bf16.mxu0 0
    %109 = vmatpush1.bf16.msra.mxu0 0
    %110 = vmatprep.mubr.bf16.mxu0 0
    %111 = vmatmul.mubr.bf16.gmra.mrb[0].mxu0 %v72
    %v112 = vpop.f32.mrb[0].mxu0
    %v113 = vadd.f32 0.0, %v112
    %v114 = vpop.f32.mrb[0].mxu0
    %v115 = vpop.f32.mrb[0].mxu0
    %v116 = vpop.f32.mrb[0].mxu0
    %117 = vdwg.mxu0
    %v118 = vpack.c.bf16 %v113, %v113
    %v119 = vld [vmem:[#allocation7] sm:$0xff]
    %v120 = vld [vmem:[#allocation7 + $0x8] sm:$0xff]
    %v121 = vld [vmem:[#allocation7 + $0x10] sm:$0xff]
    %v122 = vld [vmem:[#allocation7 + $0x18] sm:$0xff]
    %v123 = vld [vmem:[#allocation8] sm:$0x3]
    %v125 = vlaneseq
    %v126 = vshrl.u32 %v125, 7
    %v127 = vsub.s32 0, %v126
    %v128 = vrot.slane %v123, %v127
    %v129 = vlaneseq
    %v130 = vshrl.u32 %v129, 7
    %v131 = vsub.s32 1, %v130
    %v132 = vrot.slane %v123, %v131
    %v139 = vunpack.c.l.b16 %v119
    %v140 = vunpack.c.h.b16 %v119
    %v141 = vunpack.c.l.b16 %v120
    %v142 = vunpack.c.h.b16 %v120
    %v143 = vunpack.c.l.b16 %v121
    %v144 = vunpack.c.h.b16 %v121
    %v145 = vunpack.c.l.b16 %v122
    %v146 = vunpack.c.h.b16 %v122
    %v147 = vpack.c.b16 %v141, %v139
    %v148 = vpack.c.b16 %v142, %v140
    %v149 = vpack.c.b16 %v145, %v143
    %v150 = vpack.c.b16 %v146, %v144
    %vm155 = vcmask 261120
    %v157 = vsel %vm155, %v118, 0
    %159 = vmatprep.subr.bf16.mxu0 %v148
    %160 = vmatpush1.bf16.msra.mxu0 %v147
    %161 = vmatprep.subr.bf16.mxu0 %v150
    %162 = vmatpush1.bf16.msra.mxu0 %v149
    %163 = vmatprep.subr.bf16.mxu0 0
    %164 = vmatpush1.bf16.msra.mxu0 0
    %165 = vmatprep.subr.bf16.mxu0 0
    %166 = vmatpush1.bf16.msra.mxu0 0
    %167 = vmatprep.subr.bf16.mxu0 0
    %168 = vmatpush1.bf16.msra.mxu0 0
    %169 = vmatprep.subr.bf16.mxu0 0
    %170 = vmatpush1.bf16.msra.mxu0 0
    %171 = vmatprep.subr.bf16.mxu0 0
    %172 = vmatpush1.bf16.msra.mxu0 0
    %173 = vmatprep.subr.bf16.mxu0 0
    %174 = vmatpush1.bf16.msra.mxu0 0
    %175 = vmatprep.subr.bf16.mxu0 0
    %176 = vmatpush1.bf16.msra.mxu0 0
    %177 = vmatprep.subr.bf16.mxu0 0
    %178 = vmatpush1.bf16.msra.mxu0 0
    %179 = vmatprep.subr.bf16.mxu0 0
    %180 = vmatpush1.bf16.msra.mxu0 0
    %181 = vmatprep.subr.bf16.mxu0 0
    %182 = vmatpush1.bf16.msra.mxu0 0
    %183 = vmatprep.subr.bf16.mxu0 0
    %184 = vmatpush1.bf16.msra.mxu0 0
    %185 = vmatprep.subr.bf16.mxu0 0
    %186 = vmatpush1.bf16.msra.mxu0 0
    %187 = vmatprep.subr.bf16.mxu0 0
    %188 = vmatpush1.bf16.msra.mxu0 0
    %189 = vmatprep.subr.bf16.mxu0 0
    %190 = vmatpush1.bf16.msra.mxu0 0
    %191 = vmatprep.mubr.bf16.mxu0 0
    %192 = vmatmul.mubr.bf16.gmra.mrb[0].mxu0 %v157
    %v193 = vpop.f32.mrb[0].mxu0
    %v194 = vadd.f32 %v128, %v193
    %v195 = vpop.f32.mrb[0].mxu0
    %v196 = vadd.f32 %v132, %v195
    %v197 = vpop.f32.mrb[0].mxu0
    %v198 = vpop.f32.mrb[0].mxu0
    %199 = vdwg.mxu0
    %v200 = vmax.f32 %v194, 0.0
    %v201 = vmax.f32 %v196, 0.0
    %v202 = vpack.c.bf16 %v200, %v200
    %v203 = vpack.c.bf16 %v201, %v201
    %v206 = vunpack.c.l.b16 %v202
    %v207 = vunpack.c.l.b16 %v203
    %v208 = vpack.c.b16 %v207, %v206
    %210 = vst [vmem:[#allocation10] sm:$0xff] %v208
    // Predicated region
    $region34: #{tpu_custom_call.1} parent=1 // pred_check
      _
    $region35: #{tpu_custom_call.1} parent=1 // pred_check_branch
      %212 = sbr.rel (0) target = $region37
    $region36: #{tpu_custom_call.1} parent=1 // pred_region
      %s214 = ssub.s32 128, 128
      %215 = vsyncadd [#allocation4], %s214
      %s217 = sshll.u32 [#allocation10], 4
      %s218 = int_to_ptr.vmem [resolvable:$true] %s217
      %220 = dma.vmem_to_hbm [thread:$0]  %s218, 128, %s4, [#allocation4]
    $region37: #{tpu_custom_call.1} parent=1 // pred_fallthru
      _
    // Predicated region
    $region38: #{tpu_custom_call.1} parent=1 // pred_check
      _
    $region39: #{tpu_custom_call.1} parent=1 // pred_check_branch
      %222 = sbr.rel (0) target = $region41
    $region40: #{tpu_custom_call.1} parent=1 // pred_region
      %223 = dma.done [#allocation4], 128
    $region41: #{tpu_custom_call.1} parent=1 // pred_fallthru
      _
    %224 = vsyncpa [#allocation3], 1
    %225 = vsyncpa [#allocation6], 1
    %226 = vsyncpa [#allocation9], 1
    %227 = vsyncpa [#allocation4], 1

</llo_original>
